<compile_context>
chip_gen: v5e
topology: v5e:2x2
jax: 0.10.0
libtpu: 0.0.40
codegen_flags: <defaults>
</compile_context>

<pallas_src>
import functools

import jax
import jax.numpy as jnp
from jax.experimental import pallas as pl
from jax.experimental.pallas import tpu as pltpu


def feature_mil_kernel(x_ref, w1_ref, b1_ref, w2_ref, b2_ref, out_ref, acc_ref,
                       *, inv_n):
    # x_ref : (TB, TN, D) streamed tile of the bags
    # w1_ref: (D, H)      resident ; b1_ref: (1, H)
    # w2_ref: (H, Cp)     resident ; b2_ref: (1, Cp)   (Cp = lane-padded C)
    # out_ref: (TB, Cp)   ; acc_ref: (TB, D) f32 accumulator scratch
    k = pl.program_id(1)

    @pl.when(k == 0)
    def _():
        acc_ref[...] = jnp.zeros_like(acc_ref)

    # Accumulate raw sums over the instance axis of this tile (f32 accumulation;
    # the 1/N scale is folded into the finalize epilogue).
    acc_ref[...] += jnp.sum(x_ref[...].astype(jnp.float32), axis=1)

    @pl.when(k == pl.num_programs(1) - 1)
    def _():
        h = acc_ref[...] * inv_n                                        # (TB, D) mean
        z1 = jnp.dot(h, w1_ref[...], preferred_element_type=jnp.float32) + b1_ref[...]
        a1 = jnp.maximum(z1, 0.0)
        logits = jnp.dot(a1, w2_ref[...],
                         preferred_element_type=jnp.float32) + b2_ref[...]
        out_ref[...] = logits.astype(out_ref.dtype)


def _choose_instance_tile(n, d, itemsize, tb, target_bytes):
    """Largest TN that divides N, is a multiple of 8, and keeps one streamed
    x tile under `target_bytes`; falls back to the full extent N."""
    best = None
    for tn in range(8, n + 1, 8):
        if n % tn == 0 and tb * tn * d * itemsize <= target_bytes:
            best = tn
    return best if best is not None else n


@functools.partial(jax.jit, static_argnames=("bag_tile", "instance_tile"))
def feature_mil_forward(x, w1, b1, w2, b2, *, bag_tile=None, instance_tile=None):
    B, N, D = x.shape
    H = w1.shape[1]
    C = w2.shape[1]
    itemsize = jnp.dtype(x.dtype).itemsize

    # ---- tile selection -----------------------------------------------------
    if bag_tile is None:
        bag_tile = 8 if (B > 8 and B % 8 == 0) else B
    TB = bag_tile
    assert B % TB == 0, "B must be divisible by bag_tile"
    if instance_tile is None:
        # ~4 MiB per streamed x tile: large enough to approach HBM roofline,
        # small enough (with double buffering + resident weights) for every
        # generation's VMEM, including v7x's 64 MiB.
        instance_tile = _choose_instance_tile(N, D, itemsize, TB,
                                              target_bytes=4 << 20)
    TN = instance_tile
    assert N % TN == 0, "N must be divisible by instance_tile"

    # ---- pad the classifier output to a lane-dense width --------------------
    C_pad = max(128, ((C + 127) // 128) * 128)
    w1f = w1.astype(jnp.float32)
    b1r = b1.astype(jnp.float32).reshape(1, H)
    w2p = jnp.pad(w2.astype(jnp.float32), ((0, 0), (0, C_pad - C)))
    b2p = jnp.pad(b2.astype(jnp.float32).reshape(1, C), ((0, 0), (0, C_pad - C)))

    grid = (B // TB, N // TN)

    # ---- cost estimate + VMEM budget ----------------------------------------
    x_bytes = B * N * D * itemsize
    w_bytes = (D * H + H + H * C_pad + C_pad) * 4
    flops = 2 * B * N * D + 2 * B * D * H + 2 * B * H * C_pad
    cost = pl.CostEstimate(flops=flops, transcendentals=0,
                           bytes_accessed=x_bytes + w_bytes + B * C_pad * 4)

    vmem_needed = (2 * TB * TN * D * itemsize        # double-buffered x tile
                   + 2 * w_bytes                     # resident weights (buffered)
                   + TB * D * 4                      # accumulator scratch
                   + 2 * TB * C_pad * 4)             # output tile
    vmem_limit = int(min(max(vmem_needed + (4 << 20), 16 << 20), 48 << 20))

    kernel = functools.partial(feature_mil_kernel, inv_n=1.0 / N)

    out_padded = pl.pallas_call(
        kernel,
        out_shape=jax.ShapeDtypeStruct((B, C_pad), jnp.float32),
        grid=grid,
        in_specs=[
            pl.BlockSpec((TB, TN, D), lambda i, k: (i, k, 0)),   # streamed x
            pl.BlockSpec((D, H), lambda i, k: (0, 0)),           # resident W1
            pl.BlockSpec((1, H), lambda i, k: (0, 0)),           # resident b1
            pl.BlockSpec((H, C_pad), lambda i, k: (0, 0)),       # resident W2 (padded)
            pl.BlockSpec((1, C_pad), lambda i, k: (0, 0)),       # resident b2 (padded)
        ],
        out_specs=pl.BlockSpec((TB, C_pad), lambda i, k: (i, 0)),
        scratch_shapes=[pltpu.VMEM((TB, D), jnp.float32)],
        compiler_params=pltpu.CompilerParams(
            dimension_semantics=("parallel", "arbitrary"),
            vmem_limit_bytes=vmem_limit,
        ),
        cost_estimate=cost,
    )(x, w1f, b1r, w2p, b2p)

    return out_padded[:, :C]


def xavier_normal(key, fan_in, fan_out, dtype=jnp.float32):
    # nn.init.xavier_normal_: std = sqrt(2 / (fan_in + fan_out)), gain = 1
    std = (2.0 / (fan_in + fan_out)) ** 0.5
    return std * jax.random.normal(key, (fan_in, fan_out), dtype=dtype)


if __name__ == "__main__":
    # Small shapes consistent with the module: size=[D, H], n_classes=C.
    B, N = 16, 64          # 16 bags, 64 instances per bag
    D, H, C = 256, 128, 1  # size=[256, 128], n_classes=1 (PyTorch default)

    key = jax.random.PRNGKey(0)
    kx, kw1, kw2 = jax.random.split(key, 3)

    x = jax.random.normal(kx, (B, N, D), dtype=jnp.float32)

    # Deterministic parameter init mirroring initialize_weights():
    # xavier_normal weights, zero biases. Stored as (in, out) for y = x @ W + b.
    w1 = xavier_normal(kw1, D, H)
    b1 = jnp.zeros((H,), dtype=jnp.float32)
    w2 = xavier_normal(kw2, H, C)
    b2 = jnp.zeros((C,), dtype=jnp.float32)

    # instance_tile=16 -> grid=(2, 4): exercises the streamed N-reduction and
    # the parallel B-tile axis even at these toy shapes.
    logits = feature_mil_forward(x, w1, b1, w2, b2, instance_tile=16)
    jax.block_until_ready(logits)

    # Pure-JAX reference for sanity.
    h_ref = jnp.mean(x, axis=1)
    ref = jnp.maximum(h_ref @ w1 + b1.reshape(1, -1), 0.0) @ w2 + b2.reshape(1, -1)
    assert logits.shape == (B, C)
    assert jnp.allclose(logits, ref, atol=1e-4, rtol=1e-4)

    print("KERNEL_OK")
</pallas_src>

<mosaic_0001>
module attributes {stable_mosaic.version = 11 : i64} {
  func.func @feature_mil_kernel(%arg0: i32, %arg1: i32, %arg2: memref<8x16x256xf32, #tpu.memory_space<vmem>>, %arg3: memref<256x128xf32, #tpu.memory_space<vmem>>, %arg4: memref<1x128xf32, #tpu.memory_space<vmem>>, %arg5: memref<128x128xf32, #tpu.memory_space<vmem>>, %arg6: memref<1x128xf32, #tpu.memory_space<vmem>>, %arg7: memref<8x128xf32, #tpu.memory_space<vmem>>, %arg8: memref<8x256xf32, #tpu.memory_space<vmem>>) attributes {dimension_semantics = [#tpu.dimension_semantics<parallel>, #tpu.dimension_semantics<arbitrary>], iteration_bounds = array<i64: 2, 4>, scalar_prefetch = 0 : i64, scratch_operands = 1 : i64, tpu.core_type = #tpu.core_type<tc>, window_params = [{transform_indices = @transform_0, window_bounds = array<i64: 8, 16, 256>}, {pipeline_mode = #tpu.pipeline_mode<synchronous>, transform_indices = @transform_1, window_bounds = array<i64: 256, 128>}, {pipeline_mode = #tpu.pipeline_mode<synchronous>, transform_indices = @transform_2, window_bounds = array<i64: 1, 128>}, {pipeline_mode = #tpu.pipeline_mode<synchronous>, transform_indices = @transform_3, window_bounds = array<i64: 128, 128>}, {pipeline_mode = #tpu.pipeline_mode<synchronous>, transform_indices = @transform_4, window_bounds = array<i64: 1, 128>}, {transform_indices = @transform_5, window_bounds = array<i64: 8, 128>}]} {
    %c0_i32 = arith.constant 0 : i32
    %0 = arith.cmpi eq, %arg1, %c0_i32 : i32
    %1 = arith.extui %0 : i1 to i32
    %c0_i32_0 = arith.constant 0 : i32
    %2 = arith.cmpi ne, %1, %c0_i32_0 : i32
    scf.if %2 {
      %cst_8 = arith.constant 0.000000e+00 : f32
      %11 = vector.broadcast %cst_8 : f32 to vector<8x256xf32>
      %c0_9 = arith.constant 0 : index
      %c0_10 = arith.constant 0 : index
      %12 = vector.load %arg8[%c0_9, %c0_10] : memref<8x256xf32, #tpu.memory_space<vmem>>, vector<8x256xf32>
      tpu.vector_store %arg8[%c0_9, %c0_10], %11 {strides = array<i32>} : memref<8x256xf32, #tpu.memory_space<vmem>>, vector<8x256xf32>,
    } else {
    }
    %c0 = arith.constant 0 : index
    %c0_1 = arith.constant 0 : index
    %3 = vector.load %arg8[%c0, %c0_1] : memref<8x256xf32, #tpu.memory_space<vmem>>, vector<8x256xf32>
    %c0_2 = arith.constant 0 : index
    %c0_3 = arith.constant 0 : index
    %c0_4 = arith.constant 0 : index
    %4 = vector.load %arg2[%c0_2, %c0_3, %c0_4] : memref<8x16x256xf32, #tpu.memory_space<vmem>>, vector<8x16x256xf32>
    %cst = arith.constant dense<0.000000e+00> : vector<8x256xf32>
    %5 = vector.multi_reduction <add>, %4, %cst [1] : vector<8x16x256xf32> to vector<8x256xf32>
    %6 = arith.addf %3, %5 : vector<8x256xf32>
    %c0_5 = arith.constant 0 : index
    %c0_6 = arith.constant 0 : index
    %7 = vector.load %arg8[%c0_5, %c0_6] : memref<8x256xf32, #tpu.memory_space<vmem>>, vector<8x256xf32>
    tpu.vector_store %arg8[%c0_5, %c0_6], %6 {strides = array<i32>} : memref<8x256xf32, #tpu.memory_space<vmem>>, vector<8x256xf32>,
    %c3_i32 = arith.constant 3 : i32
    %8 = arith.cmpi eq, %arg1, %c3_i32 : i32
    %9 = arith.extui %8 : i1 to i32
    %c0_i32_7 = arith.constant 0 : i32
    %10 = arith.cmpi ne, %9, %c0_i32_7 : i32
    scf.if %10 {
      %c0_8 = arith.constant 0 : index
      %c0_9 = arith.constant 0 : index
      %11 = vector.load %arg8[%c0_8, %c0_9] : memref<8x256xf32, #tpu.memory_space<vmem>>, vector<8x256xf32>
      %cst_10 = arith.constant 1.562500e-02 : f32
      %12 = vector.broadcast %cst_10 : f32 to vector<8x256xf32>
      %13 = arith.mulf %11, %12 : vector<8x256xf32>
      %c0_11 = arith.constant 0 : index
      %c0_12 = arith.constant 0 : index
      %14 = vector.load %arg3[%c0_11, %c0_12] : memref<256x128xf32, #tpu.memory_space<vmem>>, vector<256x128xf32>
      %cst_13 = arith.constant dense<0.000000e+00> : vector<8x128xf32>
      %15 = tpu.matmul %13, %14, %cst_13 {dimension_numbers = #tpu.dot_dimension_numbers<[1], [0], [0], [1], [0, 0, 1, 1], [], []>} : vector<8x256xf32>, vector<256x128xf32>, vector<8x128xf32> -> vector<8x128xf32>
      %c0_14 = arith.constant 0 : index
      %c0_15 = arith.constant 0 : index
      %16 = vector.load %arg4[%c0_14, %c0_15] : memref<1x128xf32, #tpu.memory_space<vmem>>, vector<1x128xf32>
      %17 = vector.broadcast %16 : vector<1x128xf32> to vector<8x128xf32>
      %18 = arith.addf %15, %17 : vector<8x128xf32>
      %cst_16 = arith.constant 0.000000e+00 : f32
      %19 = vector.broadcast %cst_16 : f32 to vector<8x128xf32>
      %20 = arith.maximumf %18, %19 : vector<8x128xf32>
      %c0_17 = arith.constant 0 : index
      %c0_18 = arith.constant 0 : index
      %21 = vector.load %arg5[%c0_17, %c0_18] : memref<128x128xf32, #tpu.memory_space<vmem>>, vector<128x128xf32>
      %cst_19 = arith.constant dense<0.000000e+00> : vector<8x128xf32>
      %22 = tpu.matmul %20, %21, %cst_19 {dimension_numbers = #tpu.dot_dimension_numbers<[1], [0], [0], [1], [0, 0, 1, 1], [], []>} : vector<8x128xf32>, vector<128x128xf32>, vector<8x128xf32> -> vector<8x128xf32>
      %c0_20 = arith.constant 0 : index
      %c0_21 = arith.constant 0 : index
      %23 = vector.load %arg6[%c0_20, %c0_21] : memref<1x128xf32, #tpu.memory_space<vmem>>, vector<1x128xf32>
      %24 = vector.broadcast %23 : vector<1x128xf32> to vector<8x128xf32>
      %25 = arith.addf %22, %24 : vector<8x128xf32>
      %c0_22 = arith.constant 0 : index
      %c0_23 = arith.constant 0 : index
      %26 = vector.load %arg7[%c0_22, %c0_23] : memref<8x128xf32, #tpu.memory_space<vmem>>, vector<8x128xf32>
      tpu.vector_store %arg7[%c0_22, %c0_23], %25 {strides = array<i32>} : memref<8x128xf32, #tpu.memory_space<vmem>>, vector<8x128xf32>,
    } else {
    }
    return
  }
  func.func @transform_0(%arg0: i32, %arg1: i32) -> (i32, i32, i32) {
    %c0_i32 = arith.constant 0 : i32
    %c0_i32_0 = arith.constant 0 : i32
    return %arg0, %arg1, %c0_i32 : i32, i32, i32
  }
  func.func @transform_1(%arg0: i32, %arg1: i32) -> (i32, i32) {
    %c0_i32 = arith.constant 0 : i32
    %c0_i32_0 = arith.constant 0 : i32
    %c0_i32_1 = arith.constant 0 : i32
    return %c0_i32, %c0_i32_0 : i32, i32
  }
  func.func @transform_2(%arg0: i32, %arg1: i32) -> (i32, i32) {
    %c0_i32 = arith.constant 0 : i32
    %c0_i32_0 = arith.constant 0 : i32
    %c0_i32_1 = arith.constant 0 : i32
    return %c0_i32, %c0_i32_0 : i32, i32
  }
  func.func @transform_3(%arg0: i32, %arg1: i32) -> (i32, i32) {
    %c0_i32 = arith.constant 0 : i32
    %c0_i32_0 = arith.constant 0 : i32
    %c0_i32_1 = arith.constant 0 : i32
    return %c0_i32, %c0_i32_0 : i32, i32
  }
  func.func @transform_4(%arg0: i32, %arg1: i32) -> (i32, i32) {
    %c0_i32 = arith.constant 0 : i32
    %c0_i32_0 = arith.constant 0 : i32
    %c0_i32_1 = arith.constant 0 : i32
    return %c0_i32, %c0_i32_0 : i32, i32
  }
  func.func @transform_5(%arg0: i32, %arg1: i32) -> (i32, i32) {
    %c0_i32 = arith.constant 0 : i32
    %c0_i32_0 = arith.constant 0 : i32
    return %arg0, %c0_i32 : i32, i32
  }
}

</mosaic_0001>

<llo_original>
// kernel: feature_mil_forward.1
$region0: #{feature_mil_forward.1}
  #allocation0 [shape = 'u32[]', space=smem, size = 0x4, offset = 0x4, fixed_abs, tag = 'smem constant byte address 0x4 - core index']
  #allocation1 [shape = 'u32[72,128]{1,0:T(1,128)}', space=vmem, size = 0x9000, scoped, tag = 'internal scratch']
  #allocation2 [shape = 'f32[8,256]{1,0:T(8,128)}', space=vmem, size = 0x2000, scoped, tag = 'scratch operand']
  #allocation5 [shape = 's32[]', space=sflag, size = 0x4, offset = 0, fixed_abs, tag = 'sflag constant byte address 0x0 - dummy sync flag']
  %s0 = inlined_call_operand.hbm [shape: f32[16,64,256], index: 0, kind: input, shape index: {}]
  %s1 = inlined_call_operand.vmem [shape: f32[256,128], index: 1, kind: input, shape index: {}]
  %s2 = inlined_call_operand.vmem [shape: f32[1,128], index: 2, kind: input, shape index: {}]
  %s3 = inlined_call_operand.vmem [shape: f32[128,128], index: 3, kind: input, shape index: {}]
  %s4 = inlined_call_operand.vmem [shape: f32[1,128], index: 4, kind: input, shape index: {}]
  %s5 = inlined_call_operand.vmem [shape: f32[16,128], index: 5, kind: output, shape index: {}]
  %s6 = sld [smem:[#allocation0]]
  $region65: #{feature_mil_forward.1} parent=0
    _
  %s8 = ssub.s32 1, %s6
  %s9 = scalar_select 0, %s8, %s6
  $region1: #{feature_mil_forward.1} parent=0
    #allocation3 [shape = 'u8[262144]{0}', space=vmem, size = 0x40000, scoped, tag = 'input window, operand 0']
    #allocation4 [shape = 's32[2]{0}', space=sflag, size = 0x8, scoped, tag = 'scoped memory for feature_mil_forward.1']
    %10 = vsyncpa [#allocation4], 0
    %s11 = scalar_lea.sflag [#allocation4], 1
    %12 = vsyncpa %s11, 0
    loop: start=0, step=1, limit=10
    $region2: #{feature_mil_forward.1} parent=1 // loop_pre_header
      _
    $region3: #{feature_mil_forward.1} parent=1 // loop_header
      %s14 = sphi 0, %s18
      %p15 = scmp.ge.s32.totalorder %s14, 10
      %s21 = sphi 0, %s33
      %s22 = sphi 0, %s29
      %s23 = sphi 0, %s21
      %s24 = sphi 0, %s22
      %s25 = sphi 0, %s23
      %s26 = sphi 0, %s24
      %s38 = sphi 0, %s40
      %s41 = sphi 0, %s38
      %s42 = sphi 0, %s41
      %s58 = sphi 0, %s42
      %s62 = sphi 0, %s62
      %s64 = sphi 0, %s62
      %s65 = sphi 0, %s64
      %s79 = sphi 0, %s65
      %s83 = sphi 0, %s83
      %s85 = sphi 0, %s83
      %s86 = sphi 0, %s85
      %s100 = sphi 0, %s86
      %s104 = sphi 0, %s104
      %s106 = sphi 0, %s104
      %s107 = sphi 0, %s106
      %s121 = sphi 0, %s107
      %s125 = sphi 0, %s125
      %s127 = sphi 0, %s125
      %s128 = sphi 0, %s127
      %s142 = sphi 0, %s128
      %s148 = sphi 0, %s150
      %s151 = sphi 0, %s148
      %s152 = sphi 0, %s151
      %s168 = sphi 0, %s152
    $region4: #{feature_mil_forward.1} parent=1 // loop_header_branch
      %17 = sbr.rel (%p15) target = $region8
    $region5: #{feature_mil_forward.1} parent=1 // loop_body
      %s19 = ssub.s32 %s14, 1
      %s20 = ssub.s32 %s14, 2
      %s27 = sadd.s32 1, %s22
      %p28 = scmp.ge.s32.totalorder %s27, 4
      %s29 = scalar_select %p28, 0, %s27
      %s30 = sadd.s32 1, %s21
      %s31 = scalar_select %p28, %s30, %s21
      %p32 = scmp.ge.s32.totalorder %s31, 2
      %s33 = scalar_select %p32, 0, %s31
      %s34 = ssub.s32 %s21, %s33
      %s35 = ssub.s32 %s22, %s29
      %s36 = sor.u32 %s34, %s35
      %p37 = scmp.eq.s32.totalorder %s36, 0
      %s39 = sadd.s32 %s38, 1
      %s40 = scalar_select %p37, %s38, %s39
      %p43 = pneg %p37
      %p44 = scmp.eq.s32.totalorder %s14, 7
      %p45 = por %p43, %p44
      %p46 = scmp.ne.s32.totalorder %s38, %s41
      %p47 = scmp.eq.s32.totalorder %s14, 0
      %p48 = por %p46, %p47
      %p49 = scmp.ne.s32.totalorder %s38, %s41
      %p50 = scmp.eq.s32.totalorder %s19, 7
      %p51 = por %p49, %p50
      %p52 = scmp.ne.s32.totalorder %s41, %s42
      %p53 = scmp.eq.s32.totalorder %s19, 0
      %p54 = por %p52, %p53
      %p55 = scmp.ne.s32.totalorder %s41, %s42
      %p56 = scmp.eq.s32.totalorder %s20, 7
      %p57 = por %p55, %p56
      %p59 = scmp.ne.s32.totalorder %s42, %s58
      %p60 = scmp.eq.s32.totalorder %s20, 0
      %p61 = por %p59, %p60
      %s63 = sadd.s32 %s62, 1
      %p66 = scmp.eq.s32.totalorder %s14, 7
      %p67 = scmp.ne.s32.totalorder %s62, %s64
      %p68 = scmp.eq.s32.totalorder %s14, 0
      %p69 = por %p67, %p68
      %p70 = scmp.ne.s32.totalorder %s62, %s64
      %p71 = scmp.eq.s32.totalorder %s19, 7
      %p72 = por %p70, %p71
      %p73 = scmp.ne.s32.totalorder %s64, %s65
      %p74 = scmp.eq.s32.totalorder %s19, 0
      %p75 = por %p73, %p74
      %p76 = scmp.ne.s32.totalorder %s64, %s65
      %p77 = scmp.eq.s32.totalorder %s20, 7
      %p78 = por %p76, %p77
      %p80 = scmp.ne.s32.totalorder %s65, %s79
      %p81 = scmp.eq.s32.totalorder %s20, 0
      %p82 = por %p80, %p81
      %s84 = sadd.s32 %s83, 1
      %p87 = scmp.eq.s32.totalorder %s14, 7
      %p88 = scmp.ne.s32.totalorder %s83, %s85
      %p89 = scmp.eq.s32.totalorder %s14, 0
      %p90 = por %p88, %p89
      %p91 = scmp.ne.s32.totalorder %s83, %s85
      %p92 = scmp.eq.s32.totalorder %s19, 7
      %p93 = por %p91, %p92
      %p94 = scmp.ne.s32.totalorder %s85, %s86
      %p95 = scmp.eq.s32.totalorder %s19, 0
      %p96 = por %p94, %p95
      %p97 = scmp.ne.s32.totalorder %s85, %s86
      %p98 = scmp.eq.s32.totalorder %s20, 7
      %p99 = por %p97, %p98
      %p101 = scmp.ne.s32.totalorder %s86, %s100
      %p102 = scmp.eq.s32.totalorder %s20, 0
      %p103 = por %p101, %p102
      %s105 = sadd.s32 %s104, 1
      %p108 = scmp.eq.s32.totalorder %s14, 7
      %p109 = scmp.ne.s32.totalorder %s104, %s106
      %p110 = scmp.eq.s32.totalorder %s14, 0
      %p111 = por %p109, %p110
      %p112 = scmp.ne.s32.totalorder %s104, %s106
      %p113 = scmp.eq.s32.totalorder %s19, 7
      %p114 = por %p112, %p113
      %p115 = scmp.ne.s32.totalorder %s106, %s107
      %p116 = scmp.eq.s32.totalorder %s19, 0
      %p117 = por %p115, %p116
      %p118 = scmp.ne.s32.totalorder %s106, %s107
      %p119 = scmp.eq.s32.totalorder %s20, 7
      %p120 = por %p118, %p119
      %p122 = scmp.ne.s32.totalorder %s107, %s121
      %p123 = scmp.eq.s32.totalorder %s20, 0
      %p124 = por %p122, %p123
      %s126 = sadd.s32 %s125, 1
      %p129 = scmp.eq.s32.totalorder %s14, 7
      %p130 = scmp.ne.s32.totalorder %s125, %s127
      %p131 = scmp.eq.s32.totalorder %s14, 0
      %p132 = por %p130, %p131
      %p133 = scmp.ne.s32.totalorder %s125, %s127
      %p134 = scmp.eq.s32.totalorder %s19, 7
      %p135 = por %p133, %p134
      %p136 = scmp.ne.s32.totalorder %s127, %s128
      %p137 = scmp.eq.s32.totalorder %s19, 0
      %p138 = por %p136, %p137
      %p139 = scmp.ne.s32.totalorder %s127, %s128
      %p140 = scmp.eq.s32.totalorder %s20, 7
      %p141 = por %p139, %p140
      %p143 = scmp.ne.s32.totalorder %s128, %s142
      %p144 = scmp.eq.s32.totalorder %s20, 0
      %p145 = por %p143, %p144
      %s146 = ssub.s32 %s21, %s33
      %p147 = scmp.eq.s32.totalorder %s146, 0
      %s149 = sadd.s32 %s148, 1
      %s150 = scalar_select %p147, %s148, %s149
      %p153 = pneg %p147
      %p154 = scmp.eq.s32.totalorder %s14, 7
      %p155 = por %p153, %p154
      %p156 = scmp.ne.s32.totalorder %s148, %s151
      %p157 = scmp.eq.s32.totalorder %s14, 0
      %p158 = por %p156, %p157
      %p159 = scmp.ne.s32.totalorder %s148, %s151
      %p160 = scmp.eq.s32.totalorder %s19, 7
      %p161 = por %p159, %p160
      %p162 = scmp.ne.s32.totalorder %s151, %s152
      %p163 = scmp.eq.s32.totalorder %s19, 0
      %p164 = por %p162, %p163
      %p165 = scmp.ne.s32.totalorder %s151, %s152
      %p166 = scmp.eq.s32.totalorder %s20, 7
      %p167 = por %p165, %p166
      %p169 = scmp.ne.s32.totalorder %s152, %s168
      %p170 = scmp.eq.s32.totalorder %s20, 0
      %p171 = por %p169, %p170
      %p172 = scmp.le.s32.totalorder 1, %s14
      %p173 = scmp.lt.s32.totalorder %s14, 9
      %p174 = pnand %p172, %p173
      %p175 = pneg %p174
      // Predicated region
      $region9: #{feature_mil_forward.1} parent=5 // pred_check
        _
      $region10: #{feature_mil_forward.1} parent=5 // pred_check_branch
        %177 = sbr.rel (%p174) target = $region12
      $region11: #{feature_mil_forward.1} parent=5 // pred_region
        %s178 = ssub.s32 %s14, 1
        // Predicated region
        $region13: #{feature_mil_forward.1} parent=11 // pred_check
          %p179 = pneg %p75
        $region14: #{feature_mil_forward.1} parent=11 // pred_check_branch
          %181 = sbr.rel (%p179) target = $region16
        $region15: #{feature_mil_forward.1} parent=11 // pred_region
          _
        $region16: #{feature_mil_forward.1} parent=11 // pred_fallthru
          _
        // Predicated region
        $region17: #{feature_mil_forward.1} parent=11 // pred_check
          %p182 = pneg %p96
        $region18: #{feature_mil_forward.1} parent=11 // pred_check_branch
          %184 = sbr.rel (%p182) target = $region20
        $region19: #{feature_mil_forward.1} parent=11 // pred_region
          _
        $region20: #{feature_mil_forward.1} parent=11 // pred_fallthru
          _
        // Predicated region
        $region21: #{feature_mil_forward.1} parent=11 // pred_check
          %p185 = pneg %p117
        $region22: #{feature_mil_forward.1} parent=11 // pred_check_branch
          %187 = sbr.rel (%p185) target = $region24
        $region23: #{feature_mil_forward.1} parent=11 // pred_region
          _
        $region24: #{feature_mil_forward.1} parent=11 // pred_fallthru
          _
        // Predicated region
        $region25: #{feature_mil_forward.1} parent=11 // pred_check
          %p188 = pneg %p138
        $region26: #{feature_mil_forward.1} parent=11 // pred_check_branch
          %190 = sbr.rel (%p188) target = $region28
        $region27: #{feature_mil_forward.1} parent=11 // pred_region
          _
        $region28: #{feature_mil_forward.1} parent=11 // pred_fallthru
          _
      $region12: #{feature_mil_forward.1} parent=5 // pred_fallthru
        _
      %p191 = scmp.lt.s32.totalorder %s14, 8
      // Predicated region
      $region29: #{feature_mil_forward.1} parent=5 // pred_check
        %p192 = pneg %p191
      $region30: #{feature_mil_forward.1} parent=5 // pred_check_branch
        %194 = sbr.rel (%p192) target = $region32
      $region31: #{feature_mil_forward.1} parent=5 // pred_region
        // Predicated region
        $region33: #{feature_mil_forward.1} parent=31 // pred_check
          %p195 = pneg %p48
        $region34: #{feature_mil_forward.1} parent=31 // pred_check_branch
          %197 = sbr.rel (%p195) target = $region36
        $region35: #{feature_mil_forward.1} parent=31 // pred_region
          #allocation6 [shape = 'u32[6]{0}', space=smem, size = 0x18, scoped, tag = 'DMA stride descriptor']
          %s198 = sand.u32 %s38, 1
          %s199 = scalar_lea.sflag [#allocation4], %s198
          %s200 = sand.u32 %s38, 1
          %s201 = smul.addr %s200, 256
          %s202 = scalar_lea.vmem [#allocation3], %s201
          %s203 = smul.u32 8, %s21
          %s204 = smul.u32 2, %s22
          %206 = vsyncadd %s199, 0
          %s207 = smul.addr %s204, 2
          %s208 = smul.addr %s203, 16
          %s209 = sadd.s32 %s207, %s208
          %s210 = smul.addr %s209, 8
          %s211 = scalar_lea.hbm %s0, %s210
          %s213 = sshll.u32 1, 14
          %s214 = sxor.u32 4294967295, %s213
          %s216 = sld [smem:[#allocation0]]
          %s217 = sadd.s32 2, %s216
          %s219 = sshll.u32 7, 26
          %s220 = sxor.u32 4294967295, %s219
          %s221 = sand.u32 0, %s220
          %s222 = sshll.u32 %s217, 26
          %s223 = sor.u32 %s221, %s222
          %s224 = sshll.u32 %s211, 4
          %s225 = int_to_ptr.hbm [resolvable:$true] %s224
          %s226 = sshll.u32 %s202, 4
          %s227 = int_to_ptr.vmem [resolvable:$true] %s226
          %233 = sst [smem:[#allocation6]] 2048
          %s234 = scalar_lea.smem [#allocation6], 1
          %235 = sst [smem:[%s234]] 512
          %s236 = scalar_lea.smem [#allocation6], 2
          %237 = sst [smem:[%s236]] 2
          %s238 = scalar_lea.smem [#allocation6], 3
          %239 = sst [smem:[%s238]] 256
          %s240 = scalar_lea.smem [#allocation6], 4
          %241 = sst [smem:[%s240]] 256
          %s242 = scalar_lea.smem [#allocation6], 5
          %243 = sst [smem:[%s242]] 16
          %245 = dma.general %s225, 4096, %s227, %s199, [#allocation5], [#allocation6], %s223, 0
        $region36: #{feature_mil_forward.1} parent=31 // pred_fallthru
          _
      $region32: #{feature_mil_forward.1} parent=5 // pred_fallthru
        _
      %p246 = scmp.le.s32.totalorder 1, %s14
      %p247 = scmp.lt.s32.totalorder %s14, 9
      %p248 = pnand %p246, %p247
      %p249 = pneg %p248
      // Predicated region
      $region37: #{feature_mil_forward.1} parent=5 // pred_check
        _
      $region38: #{feature_mil_forward.1} parent=5 // pred_check_branch
        %251 = sbr.rel (%p248) target = $region40
      $region39: #{feature_mil_forward.1} parent=5 // pred_region
        %s252 = ssub.s32 %s14, 1
        %s253 = sand.u32 %s41, 1
        %s254 = scalar_lea.sflag [#allocation4], %s253
        %s255 = sand.u32 %s41, 1
        %s256 = smul.addr %s255, 256
        %s257 = scalar_lea.vmem [#allocation3], %s256
        // Predicated region
        $region41: #{feature_mil_forward.1} parent=39 // pred_check
          %p258 = pneg %p54
        $region42: #{feature_mil_forward.1} parent=39 // pred_check_branch
          %260 = sbr.rel (%p258) target = $region44
        $region43: #{feature_mil_forward.1} parent=39 // pred_region
          %262 = dma.done %s254, 4096
        $region44: #{feature_mil_forward.1} parent=39 // pred_fallthru
          _
        %s263 = sand.u32 %s41, 1
        %s264 = scalar_lea.sflag [#allocation4], %s263
        %s265 = sand.u32 %s41, 1
        %s266 = smul.addr %s265, 256
        %s267 = scalar_lea.vmem [#allocation3], %s266
        %p268 = pneg %p54
        %p269 = pneg %p51
        %p270 = pneg %p75
        %p271 = pneg %p72
        %p272 = pneg %p96
        %p273 = pneg %p93
        %p274 = pneg %p117
        %p275 = pneg %p114
        %p276 = pneg %p138
        %p277 = pneg %p135
        %p278 = pneg %p164
        %p279 = pneg %p161
        %p280 = scmp.lt.s32.totalorder %s23, 1
        %s281 = scalar_select %p280, %s23, 1
        %s282 = smul.addr %s281, 8
        %s283 = scalar_lea.vmem %s5, %s282
        %s284 = smul.u32 8, %s23
        %s285 = smul.u32 2, %s24
        %p286 = scmp.lt.s32.totalorder %s23, 1
        %s287 = scalar_select %p286, %s23, 1
        %s288 = smul.addr %s287, 8
        %s289 = scalar_lea.vmem %s5, %s288
        %p290 = scmp.eq.s32.totalorder %s24, 0
        // Predicated region
        $region45: #{feature_mil_forward.1} parent=39 // pred_check
          %p291 = pneg %p290
        $region46: #{feature_mil_forward.1} parent=39 // pred_check_branch
          %293 = sbr.rel (%p291) target = $region48
        $region47: #{feature_mil_forward.1} parent=39 // pred_region
          %294 = vst [vmem:[#allocation2] sm:$0xff] 0.0
          %295 = vst [vmem:[#allocation2 + $0x8] sm:$0xff] 0.0
        $region48: #{feature_mil_forward.1} parent=39 // pred_fallthru
          _
        %v296 = vld [vmem:[#allocation2] sm:$0xff]
        %v297 = vld [vmem:[#allocation2 + $0x8] sm:$0xff]
        %v298 = vld [vmem:[%s257] sm:$0xff]
        %v299 = vld [vmem:[%s257 + $0x8] sm:$0xff]
        %v300 = vld [vmem:[%s257 + $0x10] sm:$0xff]
        %v301 = vld [vmem:[%s257 + $0x18] sm:$0xff]
        %v302 = vld [vmem:[%s257 + $0x20] sm:$0xff]
        %v303 = vld [vmem:[%s257 + $0x28] sm:$0xff]
        %v304 = vld [vmem:[%s257 + $0x30] sm:$0xff]
        %v305 = vld [vmem:[%s257 + $0x38] sm:$0xff]
        %v306 = vld [vmem:[%s257 + $0x40] sm:$0xff]
        %v307 = vld [vmem:[%s257 + $0x48] sm:$0xff]
        %v308 = vld [vmem:[%s257 + $0x50] sm:$0xff]
        %v309 = vld [vmem:[%s257 + $0x58] sm:$0xff]
        %v310 = vld [vmem:[%s257 + $0x60] sm:$0xff]
        %v311 = vld [vmem:[%s257 + $0x68] sm:$0xff]
        %v312 = vld [vmem:[%s257 + $0x70] sm:$0xff]
        %v313 = vld [vmem:[%s257 + $0x78] sm:$0xff]
        %v314 = vld [vmem:[%s257 + $0x80] sm:$0xff]
        %v315 = vld [vmem:[%s257 + $0x88] sm:$0xff]
        %v316 = vld [vmem:[%s257 + $0x90] sm:$0xff]
        %v317 = vld [vmem:[%s257 + $0x98] sm:$0xff]
        %v318 = vld [vmem:[%s257 + $0xa0] sm:$0xff]
        %v319 = vld [vmem:[%s257 + $0xa8] sm:$0xff]
        %v320 = vld [vmem:[%s257 + $0xb0] sm:$0xff]
        %v321 = vld [vmem:[%s257 + $0xb8] sm:$0xff]
        %v322 = vld [vmem:[%s257 + $0xc0] sm:$0xff]
        %v323 = vld [vmem:[%s257 + $0xc8] sm:$0xff]
        %v324 = vld [vmem:[%s257 + $0xd0] sm:$0xff]
        %v325 = vld [vmem:[%s257 + $0xd8] sm:$0xff]
        %v326 = vld [vmem:[%s257 + $0xe0] sm:$0xff]
        %v327 = vld [vmem:[%s257 + $0xe8] sm:$0xff]
        %v328 = vld [vmem:[%s257 + $0xf0] sm:$0xff]
        %v329 = vld [vmem:[%s257 + $0xf8] sm:$0xff]
        %v330 = vadd.f32 %v298, %v300
        %v331 = vrot.slane %v330, 4
        %v332 = vadd.f32 %v330, %v331
        %v333 = vrot.slane %v332, 2
        %v334 = vadd.f32 %v332, %v333
        %v335 = vrot.slane %v334, 1
        %v336 = vadd.f32 %v334, %v335
        %v337 = vadd.f32 %v299, %v301
        %v338 = vrot.slane %v337, 4
        %v339 = vadd.f32 %v337, %v338
        %v340 = vrot.slane %v339, 2
        %v341 = vadd.f32 %v339, %v340
        %v342 = vrot.slane %v341, 1
        %v343 = vadd.f32 %v341, %v342
        %v344 = vadd.f32 %v302, %v304
        %v345 = vrot.slane %v344, 4
        %v346 = vadd.f32 %v344, %v345
        %v347 = vrot.slane %v346, 2
        %v348 = vadd.f32 %v346, %v347
        %v349 = vrot.slane %v348, 1
        %v350 = vadd.f32 %v348, %v349
        %v351 = vadd.f32 %v303, %v305
        %v352 = vrot.slane %v351, 4
        %v353 = vadd.f32 %v351, %v352
        %v354 = vrot.slane %v353, 2
        %v355 = vadd.f32 %v353, %v354
        %v356 = vrot.slane %v355, 1
        %v357 = vadd.f32 %v355, %v356
        %v358 = vadd.f32 %v306, %v308
        %v359 = vrot.slane %v358, 4
        %v360 = vadd.f32 %v358, %v359
        %v361 = vrot.slane %v360, 2
        %v362 = vadd.f32 %v360, %v361
        %v363 = vrot.slane %v362, 1
        %v364 = vadd.f32 %v362, %v363
        %v365 = vadd.f32 %v307, %v309
        %v366 = vrot.slane %v365, 4
        %v367 = vadd.f32 %v365, %v366
        %v368 = vrot.slane %v367, 2
        %v369 = vadd.f32 %v367, %v368
        %v370 = vrot.slane %v369, 1
        %v371 = vadd.f32 %v369, %v370
        %v372 = vadd.f32 %v310, %v312
        %v373 = vrot.slane %v372, 4
        %v374 = vadd.f32 %v372, %v373
        %v375 = vrot.slane %v374, 2
        %v376 = vadd.f32 %v374, %v375
        %v377 = vrot.slane %v376, 1
        %v378 = vadd.f32 %v376, %v377
        %v379 = vadd.f32 %v311, %v313
        %v380 = vrot.slane %v379, 4
        %v381 = vadd.f32 %v379, %v380
        %v382 = vrot.slane %v381, 2
        %v383 = vadd.f32 %v381, %v382
        %v384 = vrot.slane %v383, 1
        %v385 = vadd.f32 %v383, %v384
        %v386 = vadd.f32 %v314, %v316
        %v387 = vrot.slane %v386, 4
        %v388 = vadd.f32 %v386, %v387
        %v389 = vrot.slane %v388, 2
        %v390 = vadd.f32 %v388, %v389
        %v391 = vrot.slane %v390, 1
        %v392 = vadd.f32 %v390, %v391
        %v393 = vadd.f32 %v315, %v317
        %v394 = vrot.slane %v393, 4
        %v395 = vadd.f32 %v393, %v394
        %v396 = vrot.slane %v395, 2
        %v397 = vadd.f32 %v395, %v396
        %v398 = vrot.slane %v397, 1
        %v399 = vadd.f32 %v397, %v398
        %v400 = vadd.f32 %v318, %v320
        %v401 = vrot.slane %v400, 4
        %v402 = vadd.f32 %v400, %v401
        %v403 = vrot.slane %v402, 2
        %v404 = vadd.f32 %v402, %v403
        %v405 = vrot.slane %v404, 1
        %v406 = vadd.f32 %v404, %v405
        %v407 = vadd.f32 %v319, %v321
        %v408 = vrot.slane %v407, 4
        %v409 = vadd.f32 %v407, %v408
        %v410 = vrot.slane %v409, 2
        %v411 = vadd.f32 %v409, %v410
        %v412 = vrot.slane %v411, 1
        %v413 = vadd.f32 %v411, %v412
        %v414 = vadd.f32 %v322, %v324
        %v415 = vrot.slane %v414, 4
        %v416 = vadd.f32 %v414, %v415
        %v417 = vrot.slane %v416, 2
        %v418 = vadd.f32 %v416, %v417
        %v419 = vrot.slane %v418, 1
        %v420 = vadd.f32 %v418, %v419
        %v421 = vadd.f32 %v323, %v325
        %v422 = vrot.slane %v421, 4
        %v423 = vadd.f32 %v421, %v422
        %v424 = vrot.slane %v423, 2
        %v425 = vadd.f32 %v423, %v424
        %v426 = vrot.slane %v425, 1
        %v427 = vadd.f32 %v425, %v426
        %v428 = vadd.f32 %v326, %v328
        %v429 = vrot.slane %v428, 4
        %v430 = vadd.f32 %v428, %v429
        %v431 = vrot.slane %v430, 2
        %v432 = vadd.f32 %v430, %v431
        %v433 = vrot.slane %v432, 1
        %v434 = vadd.f32 %v432, %v433
        %v435 = vadd.f32 %v327, %v329
        %v436 = vrot.slane %v435, 4
        %v437 = vadd.f32 %v435, %v436
        %v438 = vrot.slane %v437, 2
        %v439 = vadd.f32 %v437, %v438
        %v440 = vrot.slane %v439, 1
        %v441 = vadd.f32 %v439, %v440
        %vm458 = vcmask 1041409
        %v459 = vsel %vm458, %v350, %v336
        %vm460 = vcmask 1042434
        %v461 = vsel %vm460, %v364, %v459
        %vm462 = vcmask 1043459
        %v463 = vsel %vm462, %v378, %v461
        %vm464 = vcmask 1044484
        %v465 = vsel %vm464, %v392, %v463
        %vm466 = vcmask 1045509
        %v467 = vsel %vm466, %v406, %v465
        %vm468 = vcmask 1046534
        %v469 = vsel %vm468, %v420, %v467
        %vm470 = vcmask 1047559
        %v471 = vsel %vm470, %v434, %v469
        %v472 = vsel %vm458, %v357, %v343
        %v473 = vsel %vm460, %v371, %v472
        %v474 = vsel %vm462, %v385, %v473
        %v475 = vsel %vm464, %v399, %v474
        %v476 = vsel %vm466, %v413, %v475
        %v477 = vsel %vm468, %v427, %v476
        %v478 = vsel %vm470, %v441, %v477
        %v481 = vadd.f32 %v296, %v471
        %v482 = vadd.f32 %v297, %v478
        %483 = vst [vmem:[#allocation2] sm:$0xff] %v481
        %484 = vst [vmem:[#allocation2 + $0x8] sm:$0xff] %v482
        %p485 = scmp.eq.s32.totalorder %s24, 3
        // Predicated region
        $region49: #{feature_mil_forward.1} parent=39 // pred_check
          %p486 = pneg %p485
        $region50: #{feature_mil_forward.1} parent=39 // pred_check_branch
          %488 = sbr.rel (%p486) target = $region52
        $region51: #{feature_mil_forward.1} parent=39 // pred_region
          %v489 = vld [vmem:[#allocation2] sm:$0xff]
          %v490 = vld [vmem:[#allocation2 + $0x8] sm:$0xff]
          %v491 = vmul.f32 %v489, 0.015625
          %v492 = vmul.f32 %v490, 0.015625
          %v493 = vld [vmem:[%s1] sm:$0xff]
          %v494 = vld [vmem:[%s1 + $0x8] sm:$0xff]
          %v495 = vld [vmem:[%s1 + $0x10] sm:$0xff]
          %v496 = vld [vmem:[%s1 + $0x18] sm:$0xff]
          %v497 = vld [vmem:[%s1 + $0x20] sm:$0xff]
          %v498 = vld [vmem:[%s1 + $0x28] sm:$0xff]
          %v499 = vld [vmem:[%s1 + $0x30] sm:$0xff]
          %v500 = vld [vmem:[%s1 + $0x38] sm:$0xff]
          %v501 = vld [vmem:[%s1 + $0x40] sm:$0xff]
          %v502 = vld [vmem:[%s1 + $0x48] sm:$0xff]
          %v503 = vld [vmem:[%s1 + $0x50] sm:$0xff]
          %v504 = vld [vmem:[%s1 + $0x58] sm:$0xff]
          %v505 = vld [vmem:[%s1 + $0x60] sm:$0xff]
          %v506 = vld [vmem:[%s1 + $0x68] sm:$0xff]
          %v507 = vld [vmem:[%s1 + $0x70] sm:$0xff]
          %v508 = vld [vmem:[%s1 + $0x78] sm:$0xff]
          %v509 = vld [vmem:[%s1 + $0x80] sm:$0xff]
          %v510 = vld [vmem:[%s1 + $0x88] sm:$0xff]
          %v511 = vld [vmem:[%s1 + $0x90] sm:$0xff]
          %v512 = vld [vmem:[%s1 + $0x98] sm:$0xff]
          %v513 = vld [vmem:[%s1 + $0xa0] sm:$0xff]
          %v514 = vld [vmem:[%s1 + $0xa8] sm:$0xff]
          %v515 = vld [vmem:[%s1 + $0xb0] sm:$0xff]
          %v516 = vld [vmem:[%s1 + $0xb8] sm:$0xff]
          %v517 = vld [vmem:[%s1 + $0xc0] sm:$0xff]
          %v518 = vld [vmem:[%s1 + $0xc8] sm:$0xff]
          %v519 = vld [vmem:[%s1 + $0xd0] sm:$0xff]
          %v520 = vld [vmem:[%s1 + $0xd8] sm:$0xff]
          %v521 = vld [vmem:[%s1 + $0xe0] sm:$0xff]
          %v522 = vld [vmem:[%s1 + $0xe8] sm:$0xff]
          %v523 = vld [vmem:[%s1 + $0xf0] sm:$0xff]
          %v524 = vld [vmem:[%s1 + $0xf8] sm:$0xff]
          %v525 = vld [vmem:[%s2] sm:$0x1]
          %v527 = vperm.slane %v525, 0
          %529 = vmatpush.msra.mxu0 %v508
          %530 = vmatpush.msra.mxu0 %v507
          %531 = vmatpush.msra.mxu0 %v506
          %532 = vmatpush.msra.mxu0 %v505
          %533 = vmatpush.msra.mxu0 %v504
          %534 = vmatpush.msra.mxu0 %v503
          %535 = vmatpush.msra.mxu0 %v502
          %536 = vmatpush.msra.mxu0 %v501
          %537 = vmatpush.msra.mxu0 %v500
          %538 = vmatpush.msra.mxu0 %v499
          %539 = vmatpush.msra.mxu0 %v498
          %540 = vmatpush.msra.mxu0 %v497
          %541 = vmatpush.msra.mxu0 %v496
          %542 = vmatpush.msra.mxu0 %v495
          %543 = vmatpush.msra.mxu0 %v494
          %544 = vmatpush.msra.mxu0 %v493
          %545 = vmatmul.f32.gmra.mxu0 %v491
          %v546 = vpop.f32.mrf.mxu0
          %v547 = vadd.f32 %v527, %v546
          %548 = vdwg.mxu0
          %549 = vmatpush.msra.mxu0 %v524
          %550 = vmatpush.msra.mxu0 %v523
          %551 = vmatpush.msra.mxu0 %v522
          %552 = vmatpush.msra.mxu0 %v521
          %553 = vmatpush.msra.mxu0 %v520
          %554 = vmatpush.msra.mxu0 %v519
          %555 = vmatpush.msra.mxu0 %v518
          %556 = vmatpush.msra.mxu0 %v517
          %557 = vmatpush.msra.mxu0 %v516
          %558 = vmatpush.msra.mxu0 %v515
          %559 = vmatpush.msra.mxu0 %v514
          %560 = vmatpush.msra.mxu0 %v513
          %561 = vmatpush.msra.mxu0 %v512
          %562 = vmatpush.msra.mxu0 %v511
          %563 = vmatpush.msra.mxu0 %v510
          %564 = vmatpush.msra.mxu0 %v509
          %565 = vmatmul.f32.gmra.mxu0 %v492
          %v566 = vpop.f32.mrf.mxu0
          %v567 = vadd.f32 %v547, %v566
          %568 = vdwg.mxu0
          %v569 = vmax.f32 %v567, 0.0
          %v570 = vld [vmem:[%s3] sm:$0xff]
          %v571 = vld [vmem:[%s3 + $0x8] sm:$0xff]
          %v572 = vld [vmem:[%s3 + $0x10] sm:$0xff]
          %v573 = vld [vmem:[%s3 + $0x18] sm:$0xff]
          %v574 = vld [vmem:[%s3 + $0x20] sm:$0xff]
          %v575 = vld [vmem:[%s3 + $0x28] sm:$0xff]
          %v576 = vld [vmem:[%s3 + $0x30] sm:$0xff]
          %v577 = vld [vmem:[%s3 + $0x38] sm:$0xff]
          %v578 = vld [vmem:[%s3 + $0x40] sm:$0xff]
          %v579 = vld [vmem:[%s3 + $0x48] sm:$0xff]
          %v580 = vld [vmem:[%s3 + $0x50] sm:$0xff]
          %v581 = vld [vmem:[%s3 + $0x58] sm:$0xff]
          %v582 = vld [vmem:[%s3 + $0x60] sm:$0xff]
          %v583 = vld [vmem:[%s3 + $0x68] sm:$0xff]
          %v584 = vld [vmem:[%s3 + $0x70] sm:$0xff]
          %v585 = vld [vmem:[%s3 + $0x78] sm:$0xff]
          %v586 = vld [vmem:[%s4] sm:$0x1]
          %v588 = vperm.slane %v586, 0
          %590 = vmatpush.msra.mxu0 %v585
          %591 = vmatpush.msra.mxu0 %v584
          %592 = vmatpush.msra.mxu0 %v583
          %593 = vmatpush.msra.mxu0 %v582
          %594 = vmatpush.msra.mxu0 %v581
          %595 = vmatpush.msra.mxu0 %v580
          %596 = vmatpush.msra.mxu0 %v579
          %597 = vmatpush.msra.mxu0 %v578
          %598 = vmatpush.msra.mxu0 %v577
          %599 = vmatpush.msra.mxu0 %v576
          %600 = vmatpush.msra.mxu0 %v575
          %601 = vmatpush.msra.mxu0 %v574
          %602 = vmatpush.msra.mxu0 %v573
          %603 = vmatpush.msra.mxu0 %v572
          %604 = vmatpush.msra.mxu0 %v571
          %605 = vmatpush.msra.mxu0 %v570
          %606 = vmatmul.f32.gmra.mxu0 %v569
          %v607 = vpop.f32.mrf.mxu0
          %v608 = vadd.f32 %v588, %v607
          %609 = vdwg.mxu0
          %610 = vst [vmem:[%s289] sm:$0xff] %v608
        $region52: #{feature_mil_forward.1} parent=39 // pred_fallthru
          _
        %p611 = scmp.lt.s32.totalorder %s23, 1
        %s612 = scalar_select %p611, %s23, 1
        %s613 = smul.addr %s612, 8
        %s614 = scalar_lea.vmem %s5, %s613
        // Predicated region
        $region53: #{feature_mil_forward.1} parent=39 // pred_check
          %p615 = pneg %p161
        $region54: #{feature_mil_forward.1} parent=39 // pred_check_branch
          %617 = sbr.rel (%p615) target = $region56
        $region55: #{feature_mil_forward.1} parent=39 // pred_region
          _
        $region56: #{feature_mil_forward.1} parent=39 // pred_fallthru
          _
      $region40: #{feature_mil_forward.1} parent=5 // pred_fallthru
        _
      %p618 = scmp.le.s32.totalorder 2, %s14
      // Predicated region
      $region57: #{feature_mil_forward.1} parent=5 // pred_check
        %p619 = pneg %p618
      $region58: #{feature_mil_forward.1} parent=5 // pred_check_branch
        %621 = sbr.rel (%p619) target = $region60
      $region59: #{feature_mil_forward.1} parent=5 // pred_region
        %s622 = ssub.s32 %s14, 2
        // Predicated region
        $region61: #{feature_mil_forward.1} parent=59 // pred_check
          %p623 = pneg %p167
        $region62: #{feature_mil_forward.1} parent=59 // pred_check_branch
          %625 = sbr.rel (%p623) target = $region64
        $region63: #{feature_mil_forward.1} parent=59 // pred_region
          %p626 = scmp.lt.s32.totalorder %s25, 1
          %s627 = scalar_select %p626, %s25, 1
          %s628 = smul.addr %s627, 8
          %s629 = scalar_lea.vmem %s5, %s628
        $region64: #{feature_mil_forward.1} parent=59 // pred_fallthru
          _
      $region60: #{feature_mil_forward.1} parent=5 // pred_fallthru
        _
    $region6: #{feature_mil_forward.1} parent=1 // loop_footer
      %s18 = sadd.s32 1, %s14
    $region7: #{feature_mil_forward.1} parent=1 // loop_footer_branch
      %13 = sbr.rel target = $region3
    $region8: #{feature_mil_forward.1} parent=1 // loop_exit
      _
    %630 = vsyncpa [#allocation4], 1
    %s631 = scalar_lea.sflag [#allocation4], 1
    %632 = vsyncpa %s631, 1

</llo_original>
